<compile_context>
chip_gen: v7x
topology: tpu7x:2x2x1
jax: 0.10.0
libtpu: 0.0.40
codegen_flags: <defaults>
</compile_context>

<pallas_src>
import functools
import math

import jax
import jax.numpy as jnp
from jax import lax
from jax.experimental import pallas as pl
from jax.experimental.pallas import tpu as pltpu


def _layer_norm(g, w, b, eps):
    """LayerNorm over the last (3H) axis, matching torch.nn.LayerNorm (biased var)."""
    mu = jnp.mean(g, axis=-1, keepdims=True)
    var = jnp.mean(jnp.square(g - mu), axis=-1, keepdims=True)
    return (g - mu) * lax.rsqrt(var + eps) * w + b


def lngru_cell_kernel(x_ref, h0_ref, wx_ref, gxw_ref, gxb_ref,
                      wh_ref, ghw_ref, ghb_ref, out_ref, *, hidden_size, eps):
    """x_ref: (T, B, input_size); h0_ref: (B, H); wx_ref: (input_size, 3H);
    wh_ref: (H, 3H); g*w/g*b: (1, 3H); out_ref: (T, B, H)."""
    T, B, In = x_ref.shape
    H = hidden_size

    # Hoist every loop-invariant load out of the recurrence.
    Wx = wx_ref[...]
    Wh = wh_ref[...]
    gxw = gxw_ref[...]
    gxb = gxb_ref[...]
    ghw = ghw_ref[...]
    ghb = ghb_ref[...]

    # ---- input path: independent of the recurrent state -> one big matmul ----
    x_all = x_ref[...].reshape(T * B, In)
    gate_x_all = _layer_norm(
        jnp.dot(x_all, Wx, preferred_element_type=jnp.float32), gxw, gxb, eps)

    # ---- recurrence (static trip count -> fully unrolled; T == 1 in forward) ----
    h = h0_ref[...]
    for t in range(T):
        gate_x = gate_x_all[t * B:(t + 1) * B]          # static slice, no XLU gather
        gate_h = _layer_norm(
            jnp.dot(h, Wh, preferred_element_type=jnp.float32), ghw, ghb, eps)

        i_r, i_i, i_n = gate_x[:, :H], gate_x[:, H:2 * H], gate_x[:, 2 * H:]
        h_r, h_i, h_n = gate_h[:, :H], gate_h[:, H:2 * H], gate_h[:, 2 * H:]

        resetgate = jax.nn.sigmoid(i_r + h_r)
        inputgate = jax.nn.sigmoid(i_i + h_i)
        newgate = jnp.tanh(i_n + resetgate * h_n)
        h = newgate + inputgate * (h - newgate)

        out_ref[t] = h


def layer_norm_gru_cell(x, hidden, params, *, eps=1e-5):
    """Exact equivalent of LayerNormGRUCell.forward(x, hidden).

    x: (B, input_size)    -> returns (B, H)        (the PyTorch forward)
    x: (T, B, input_size) -> returns (T, B, H)     (cell applied sequentially)
    """
    wx, gxw, gxb, wh, ghw, ghb = params
    single_step = (x.ndim == 2)
    if single_step:
        x = x[None]
    T, B, _ = x.shape
    H = hidden.shape[-1]

    vmem = pl.BlockSpec(memory_space=pltpu.MemorySpace.VMEM)
    out = pl.pallas_call(
        functools.partial(lngru_cell_kernel, hidden_size=H, eps=eps),
        out_shape=jax.ShapeDtypeStruct((T, B, H), jnp.float32),
        in_specs=[vmem] * 8,
        out_specs=vmem,
    )(x.astype(jnp.float32), hidden.astype(jnp.float32),
      wx, gxw, gxb, wh, ghw, ghb)

    return out[0] if single_step else out


def init_layernorm_gru_params(key, input_size, hidden_size, Tmax):
    """Deterministic re-implementation of LayerNormGRUCell.reset_parameters,
    repacked into kernel layout (channel-last weights, (1, 3H) norm params)."""
    std = 1.0 / math.sqrt(hidden_size)
    k1, k2, k3 = jax.random.split(key, 3)
    w_x2h = jax.random.uniform(k1, (3 * hidden_size, input_size), jnp.float32,
                               -std, std)                       # torch layout (3H, In)
    w_h2h = jax.random.uniform(k2, (3 * hidden_size, hidden_size), jnp.float32,
                               -std, std)                       # torch layout (3H, H)
    gxw = 0.1 * jnp.ones((3 * hidden_size,), jnp.float32)       # x2h_norm.weight
    gxb = jnp.zeros((3 * hidden_size,), jnp.float32)            # x2h_norm.bias
    ghw = 0.1 * jnp.ones((3 * hidden_size,), jnp.float32)       # h2h_norm.weight
    chrono = jnp.log(jax.random.uniform(k3, (hidden_size,), jnp.float32,
                                        1.0, float(Tmax - 1)))
    ghb = jnp.zeros((3 * hidden_size,), jnp.float32).at[
        hidden_size:2 * hidden_size].set(chrono)                # h2h_norm.bias (chrono)
    return (w_x2h.T, gxw[None, :], gxb[None, :],
            w_h2h.T, ghw[None, :], ghb[None, :])


def reference_forward(x, hidden, params, *, eps=1e-5):
    """Pure-JAX replica of the PyTorch forward, used for verification."""
    wx, gxw, gxb, wh, ghw, ghb = params

    def ln(g, w, b):
        mu = jnp.mean(g, axis=-1, keepdims=True)
        var = jnp.mean(jnp.square(g - mu), axis=-1, keepdims=True)
        return (g - mu) / jnp.sqrt(var + eps) * w + b

    H = hidden.shape[-1]
    gate_x = ln(jnp.dot(x, wx, precision=lax.Precision.HIGHEST), gxw, gxb)
    gate_h = ln(jnp.dot(hidden, wh, precision=lax.Precision.HIGHEST), ghw, ghb)
    i_r, i_i, i_n = gate_x[:, :H], gate_x[:, H:2 * H], gate_x[:, 2 * H:]
    h_r, h_i, h_n = gate_h[:, :H], gate_h[:, H:2 * H], gate_h[:, 2 * H:]
    r = jax.nn.sigmoid(i_r + h_r)
    z = jax.nn.sigmoid(i_i + h_i)
    n = jnp.tanh(i_n + r * h_n)
    return n + z * (hidden - n)


if __name__ == "__main__":
    B, INPUT_SIZE, HIDDEN_SIZE, TMAX = 4, 8, 32, 50

    key = jax.random.PRNGKey(0)
    kp, kx, kh, ks = jax.random.split(key, 4)
    params = init_layernorm_gru_params(kp, INPUT_SIZE, HIDDEN_SIZE, TMAX)

    # --- single-step (the PyTorch module's forward) ---
    x = jax.random.normal(kx, (B, INPUT_SIZE), dtype=jnp.float32)
    hidden = jax.random.normal(kh, (B, HIDDEN_SIZE), dtype=jnp.float32)

    hy = layer_norm_gru_cell(x, hidden, params)
    jax.block_until_ready(hy)
    assert hy.shape == (B, HIDDEN_SIZE)

    hy_ref = reference_forward(x, hidden, params)
    assert jnp.allclose(hy, hy_ref, atol=2e-3, rtol=2e-3), float(
        jnp.max(jnp.abs(hy - hy_ref)))

    # --- short sequence (cell applied T times, all in one launch) ---
    T = 3
    xs = jax.random.normal(ks, (T, B, INPUT_SIZE), dtype=jnp.float32)
    hs = layer_norm_gru_cell(xs, hidden, params)
    jax.block_until_ready(hs)

    h_ref = hidden
    for t in range(T):
        h_ref = reference_forward(xs[t], h_ref, params)
        assert jnp.allclose(hs[t], h_ref, atol=2e-3, rtol=2e-3), (
            t, float(jnp.max(jnp.abs(hs[t] - h_ref))))

    print("KERNEL_OK")
</pallas_src>

<mosaic_0001>
module attributes {stable_mosaic.version = 11 : i64} {
  func.func @lngru_cell_kernel(%arg0: memref<1x4x8xf32, #tpu.memory_space<vmem>>, %arg1: memref<4x32xf32, #tpu.memory_space<vmem>>, %arg2: memref<8x96xf32, #tpu.memory_space<vmem>>, %arg3: memref<1x96xf32, #tpu.memory_space<vmem>>, %arg4: memref<1x96xf32, #tpu.memory_space<vmem>>, %arg5: memref<32x96xf32, #tpu.memory_space<vmem>>, %arg6: memref<1x96xf32, #tpu.memory_space<vmem>>, %arg7: memref<1x96xf32, #tpu.memory_space<vmem>>, %arg8: memref<1x4x32xf32, #tpu.memory_space<vmem>>) attributes {dimension_semantics = [], scalar_prefetch = 0 : i64, scratch_operands = 0 : i64, tpu.core_type = #tpu.core_type<tc>} {
    %c0 = arith.constant 0 : index
    %c0_0 = arith.constant 0 : index
    %0 = vector.load %arg2[%c0, %c0_0] : memref<8x96xf32, #tpu.memory_space<vmem>>, vector<8x96xf32>
    %c0_1 = arith.constant 0 : index
    %c0_2 = arith.constant 0 : index
    %1 = vector.load %arg5[%c0_1, %c0_2] : memref<32x96xf32, #tpu.memory_space<vmem>>, vector<32x96xf32>
    %c0_3 = arith.constant 0 : index
    %c0_4 = arith.constant 0 : index
    %2 = vector.load %arg3[%c0_3, %c0_4] : memref<1x96xf32, #tpu.memory_space<vmem>>, vector<1x96xf32>
    %c0_5 = arith.constant 0 : index
    %c0_6 = arith.constant 0 : index
    %3 = vector.load %arg4[%c0_5, %c0_6] : memref<1x96xf32, #tpu.memory_space<vmem>>, vector<1x96xf32>
    %c0_7 = arith.constant 0 : index
    %c0_8 = arith.constant 0 : index
    %4 = vector.load %arg6[%c0_7, %c0_8] : memref<1x96xf32, #tpu.memory_space<vmem>>, vector<1x96xf32>
    %c0_9 = arith.constant 0 : index
    %c0_10 = arith.constant 0 : index
    %5 = vector.load %arg7[%c0_9, %c0_10] : memref<1x96xf32, #tpu.memory_space<vmem>>, vector<1x96xf32>
    %c0_11 = arith.constant 0 : index
    %c0_12 = arith.constant 0 : index
    %c0_13 = arith.constant 0 : index
    %6 = vector.load %arg0[%c0_11, %c0_12, %c0_13] : memref<1x4x8xf32, #tpu.memory_space<vmem>>, vector<1x4x8xf32>
    %7 = vector.shape_cast %6 : vector<1x4x8xf32> to vector<4x8xf32>
    %cst = arith.constant dense<0.000000e+00> : vector<4x96xf32>
    %8 = tpu.matmul %7, %0, %cst {dimension_numbers = #tpu.dot_dimension_numbers<[1], [0], [0], [1], [0, 0, 1, 1], [], []>} : vector<4x8xf32>, vector<8x96xf32>, vector<4x96xf32> -> vector<4x96xf32>
    %cst_14 = arith.constant dense<0.000000e+00> : vector<4xf32>
    %9 = vector.multi_reduction <add>, %8, %cst_14 [1] : vector<4x96xf32> to vector<4xf32>
    %10 = vector.shape_cast %9 : vector<4xf32> to vector<4x1xf32>
    %cst_15 = arith.constant 9.600000e+01 : f32
    %11 = vector.broadcast %cst_15 : f32 to vector<4x1xf32>
    %12 = arith.divf %10, %11 : vector<4x1xf32>
    %13 = vector.broadcast %12 : vector<4x1xf32> to vector<4x96xf32>
    %14 = arith.subf %8, %13 : vector<4x96xf32>
    %15 = arith.mulf %14, %14 : vector<4x96xf32>
    %cst_16 = arith.constant dense<0.000000e+00> : vector<4xf32>
    %16 = vector.multi_reduction <add>, %15, %cst_16 [1] : vector<4x96xf32> to vector<4xf32>
    %17 = vector.shape_cast %16 : vector<4xf32> to vector<4x1xf32>
    %cst_17 = arith.constant 9.600000e+01 : f32
    %18 = vector.broadcast %cst_17 : f32 to vector<4x1xf32>
    %19 = arith.divf %17, %18 : vector<4x1xf32>
    %20 = vector.broadcast %12 : vector<4x1xf32> to vector<4x96xf32>
    %21 = arith.subf %8, %20 : vector<4x96xf32>
    %cst_18 = arith.constant 9.99999974E-6 : f32
    %22 = vector.broadcast %cst_18 : f32 to vector<4x1xf32>
    %23 = arith.addf %19, %22 : vector<4x1xf32>
    %24 = math.rsqrt %23 : vector<4x1xf32>
    %25 = vector.broadcast %24 : vector<4x1xf32> to vector<4x96xf32>
    %26 = arith.mulf %21, %25 : vector<4x96xf32>
    %27 = vector.broadcast %2 : vector<1x96xf32> to vector<4x96xf32>
    %28 = arith.mulf %26, %27 : vector<4x96xf32>
    %29 = vector.broadcast %3 : vector<1x96xf32> to vector<4x96xf32>
    %30 = arith.addf %28, %29 : vector<4x96xf32>
    %c0_19 = arith.constant 0 : index
    %c0_20 = arith.constant 0 : index
    %31 = vector.load %arg1[%c0_19, %c0_20] : memref<4x32xf32, #tpu.memory_space<vmem>>, vector<4x32xf32>
    %cst_21 = arith.constant dense<0.000000e+00> : vector<4x96xf32>
    %32 = tpu.matmul %31, %1, %cst_21 {dimension_numbers = #tpu.dot_dimension_numbers<[1], [0], [0], [1], [0, 0, 1, 1], [], []>} : vector<4x32xf32>, vector<32x96xf32>, vector<4x96xf32> -> vector<4x96xf32>
    %cst_22 = arith.constant dense<0.000000e+00> : vector<4xf32>
    %33 = vector.multi_reduction <add>, %32, %cst_22 [1] : vector<4x96xf32> to vector<4xf32>
    %34 = vector.shape_cast %33 : vector<4xf32> to vector<4x1xf32>
    %cst_23 = arith.constant 9.600000e+01 : f32
    %35 = vector.broadcast %cst_23 : f32 to vector<4x1xf32>
    %36 = arith.divf %34, %35 : vector<4x1xf32>
    %37 = vector.broadcast %36 : vector<4x1xf32> to vector<4x96xf32>
    %38 = arith.subf %32, %37 : vector<4x96xf32>
    %39 = arith.mulf %38, %38 : vector<4x96xf32>
    %cst_24 = arith.constant dense<0.000000e+00> : vector<4xf32>
    %40 = vector.multi_reduction <add>, %39, %cst_24 [1] : vector<4x96xf32> to vector<4xf32>
    %41 = vector.shape_cast %40 : vector<4xf32> to vector<4x1xf32>
    %cst_25 = arith.constant 9.600000e+01 : f32
    %42 = vector.broadcast %cst_25 : f32 to vector<4x1xf32>
    %43 = arith.divf %41, %42 : vector<4x1xf32>
    %44 = vector.broadcast %36 : vector<4x1xf32> to vector<4x96xf32>
    %45 = arith.subf %32, %44 : vector<4x96xf32>
    %cst_26 = arith.constant 9.99999974E-6 : f32
    %46 = vector.broadcast %cst_26 : f32 to vector<4x1xf32>
    %47 = arith.addf %43, %46 : vector<4x1xf32>
    %48 = math.rsqrt %47 : vector<4x1xf32>
    %49 = vector.broadcast %48 : vector<4x1xf32> to vector<4x96xf32>
    %50 = arith.mulf %45, %49 : vector<4x96xf32>
    %51 = vector.broadcast %4 : vector<1x96xf32> to vector<4x96xf32>
    %52 = arith.mulf %50, %51 : vector<4x96xf32>
    %53 = vector.broadcast %5 : vector<1x96xf32> to vector<4x96xf32>
    %54 = arith.addf %52, %53 : vector<4x96xf32>
    %55 = vector.extract_strided_slice %30 {offsets = [0, 0], sizes = [4, 32], strides = [1, 1]} : vector<4x96xf32> to vector<4x32xf32>
    %56 = vector.extract_strided_slice %30 {offsets = [0, 32], sizes = [4, 32], strides = [1, 1]} : vector<4x96xf32> to vector<4x32xf32>
    %57 = vector.extract_strided_slice %30 {offsets = [0, 64], sizes = [4, 32], strides = [1, 1]} : vector<4x96xf32> to vector<4x32xf32>
    %58 = vector.extract_strided_slice %54 {offsets = [0, 0], sizes = [4, 32], strides = [1, 1]} : vector<4x96xf32> to vector<4x32xf32>
    %59 = vector.extract_strided_slice %54 {offsets = [0, 32], sizes = [4, 32], strides = [1, 1]} : vector<4x96xf32> to vector<4x32xf32>
    %60 = vector.extract_strided_slice %54 {offsets = [0, 64], sizes = [4, 32], strides = [1, 1]} : vector<4x96xf32> to vector<4x32xf32>
    %61 = arith.addf %55, %58 : vector<4x32xf32>
    %62 = arith.negf %61 : vector<4x32xf32>
    %63 = math.exp %62 : vector<4x32xf32>
    %cst_27 = arith.constant 1.000000e+00 : f32
    %64 = vector.broadcast %cst_27 : f32 to vector<4x32xf32>
    %65 = arith.addf %64, %63 : vector<4x32xf32>
    %66 = arith.divf %64, %65 : vector<4x32xf32>
    %67 = arith.addf %56, %59 : vector<4x32xf32>
    %68 = arith.negf %67 : vector<4x32xf32>
    %69 = math.exp %68 : vector<4x32xf32>
    %cst_28 = arith.constant 1.000000e+00 : f32
    %70 = vector.broadcast %cst_28 : f32 to vector<4x32xf32>
    %71 = arith.addf %70, %69 : vector<4x32xf32>
    %72 = arith.divf %70, %71 : vector<4x32xf32>
    %73 = arith.mulf %66, %60 : vector<4x32xf32>
    %74 = arith.addf %57, %73 : vector<4x32xf32>
    %75 = math.tanh %74 : vector<4x32xf32>
    %76 = arith.subf %31, %75 : vector<4x32xf32>
    %77 = arith.mulf %72, %76 : vector<4x32xf32>
    %78 = arith.addf %75, %77 : vector<4x32xf32>
    %c0_29 = arith.constant 0 : index
    %c0_30 = arith.constant 0 : index
    %c0_31 = arith.constant 0 : index
    %79 = vector.load %arg8[%c0_29, %c0_30, %c0_31] : memref<1x4x32xf32, #tpu.memory_space<vmem>>, vector<1x4x32xf32>
    %80 = vector.shape_cast %79 : vector<1x4x32xf32> to vector<4x32xf32>
    %81 = vector.shape_cast %78 : vector<4x32xf32> to vector<1x4x32xf32>
    tpu.vector_store %arg8[%c0_29, %c0_30, %c0_31], %81 {strides = array<i32>} : memref<1x4x32xf32, #tpu.memory_space<vmem>>, vector<1x4x32xf32>,
    return
  }
}

</mosaic_0001>

<llo_original>
// kernel: tpu_custom_call.1
$region0: #{tpu_custom_call.1}
  #allocation0 [shape = 'u32[]', space=smem, size = 0x4, offset = 0x4, fixed_abs, tag = 'smem constant byte address 0x4 - core index']
  #allocation1 [shape = 'u32[144,128]{1,0:T(1,128)}', space=vmem, size = 0x12000, scoped, tag = 'internal scratch']
  %s0 = inlined_call_operand.hbm [shape: f32[1,4,8], index: 0, kind: input, shape index: {}]
  %s1 = inlined_call_operand.hbm [shape: f32[4,32], index: 1, kind: input, shape index: {}]
  %s2 = inlined_call_operand.hbm [shape: f32[8,96], index: 2, kind: input, shape index: {}]
  %s3 = inlined_call_operand.vmem [shape: f32[1,96], index: 3, kind: input, shape index: {}]
  %s4 = inlined_call_operand.vmem [shape: f32[1,96], index: 4, kind: input, shape index: {}]
  %s5 = inlined_call_operand.hbm [shape: f32[32,96], index: 5, kind: input, shape index: {}]
  %s6 = inlined_call_operand.vmem [shape: f32[1,96], index: 6, kind: input, shape index: {}]
  %s7 = inlined_call_operand.vmem [shape: f32[1,96], index: 7, kind: input, shape index: {}]
  %s8 = inlined_call_operand.hbm [shape: f32[1,4,32], index: 8, kind: output, shape index: {}]
  %s9 = sld [smem:[#allocation0]]
  $region58: #{tpu_custom_call.1} parent=0
    _
  %s11 = ssub.s32 1, %s9
  %s12 = scalar_select 0, %s11, %s9
  $region1: #{tpu_custom_call.1} parent=0
    #allocation2 [shape = 'u8[2048]{0}', space=vmem, size = 0x800, scoped, tag = 'input window, operand 0, single buffered']
    #allocation3 [shape = 's32[1]{0}', space=sflag, size = 0x4, scoped, tag = 'scoped memory for tpu_custom_call.1']
    #allocation4 [shape = 's32[1]{0}', space=sflag, size = 0x4, scoped, tag = 'scoped memory for tpu_custom_call.1']
    #allocation5 [shape = 'u8[2048]{0}', space=vmem, size = 0x800, scoped, tag = 'input window, operand 1, single buffered']
    #allocation6 [shape = 's32[1]{0}', space=sflag, size = 0x4, scoped, tag = 'scoped memory for tpu_custom_call.1']
    #allocation7 [shape = 'u8[4096]{0}', space=vmem, size = 0x1000, scoped, tag = 'input window, operand 2, single buffered']
    #allocation8 [shape = 'u8[16384]{0}', space=vmem, size = 0x4000, scoped, tag = 'input window, operand 5, single buffered']
    #allocation9 [shape = 's32[1]{0}', space=sflag, size = 0x4, scoped, tag = 'scoped memory for tpu_custom_call.1']
    #allocation10 [shape = 'u8[2048]{0}', space=vmem, size = 0x800, scoped, tag = 'output window, operand 0, single buffered']
    %13 = vsyncpa [#allocation3], 0
    %14 = vsyncpa [#allocation6], 0
    %15 = vsyncpa [#allocation9], 0
    %16 = vsyncpa [#allocation4], 0
    // Predicated region
    $region2: #{tpu_custom_call.1} parent=1 // pred_check
      _
    $region3: #{tpu_custom_call.1} parent=1 // pred_check_branch
      %18 = sbr.rel (0) target = $region5
    $region4: #{tpu_custom_call.1} parent=1 // pred_region
      %s20 = ssub.s32 64, 64
      %21 = vsyncadd [#allocation3], %s20
      %s23 = sshll.u32 [#allocation2], 4
      %s24 = int_to_ptr.vmem [resolvable:$true] %s23
      %26 = dma.hbm_to_vmem [thread:$0]  %s0, 64, %s24, [#allocation3]
    $region5: #{tpu_custom_call.1} parent=1 // pred_fallthru
      _
    // Predicated region
    $region6: #{tpu_custom_call.1} parent=1 // pred_check
      _
    $region7: #{tpu_custom_call.1} parent=1 // pred_check_branch
      %28 = sbr.rel (0) target = $region9
    $region8: #{tpu_custom_call.1} parent=1 // pred_region
      %s30 = ssub.s32 64, 64
      %31 = vsyncadd [#allocation6], %s30
      %s33 = sshll.u32 [#allocation5], 4
      %s34 = int_to_ptr.vmem [resolvable:$true] %s33
      %36 = dma.hbm_to_vmem [thread:$0]  %s1, 64, %s34, [#allocation6]
    $region9: #{tpu_custom_call.1} parent=1 // pred_fallthru
      _
    // Predicated region
    $region10: #{tpu_custom_call.1} parent=1 // pred_check
      _
    $region11: #{tpu_custom_call.1} parent=1 // pred_check_branch
      %38 = sbr.rel (0) target = $region13
    $region12: #{tpu_custom_call.1} parent=1 // pred_region
      %s40 = ssub.s32 128, 128
      %41 = vsyncadd [#allocation6], %s40
      %s43 = sshll.u32 [#allocation7], 4
      %s44 = int_to_ptr.vmem [resolvable:$true] %s43
      %46 = dma.hbm_to_vmem [thread:$0]  %s2, 128, %s44, [#allocation6]
    $region13: #{tpu_custom_call.1} parent=1 // pred_fallthru
      _
    // Predicated region
    $region14: #{tpu_custom_call.1} parent=1 // pred_check
      _
    $region15: #{tpu_custom_call.1} parent=1 // pred_check_branch
      %48 = sbr.rel (0) target = $region17
    $region16: #{tpu_custom_call.1} parent=1 // pred_region
      _
    $region17: #{tpu_custom_call.1} parent=1 // pred_fallthru
      _
    // Predicated region
    $region18: #{tpu_custom_call.1} parent=1 // pred_check
      _
    $region19: #{tpu_custom_call.1} parent=1 // pred_check_branch
      %50 = sbr.rel (0) target = $region21
    $region20: #{tpu_custom_call.1} parent=1 // pred_region
      _
    $region21: #{tpu_custom_call.1} parent=1 // pred_fallthru
      _
    // Predicated region
    $region22: #{tpu_custom_call.1} parent=1 // pred_check
      _
    $region23: #{tpu_custom_call.1} parent=1 // pred_check_branch
      %52 = sbr.rel (0) target = $region25
    $region24: #{tpu_custom_call.1} parent=1 // pred_region
      %s54 = ssub.s32 512, 512
      %55 = vsyncadd [#allocation9], %s54
      %s56 = sshll.u32 [#allocation8], 4
      %s57 = int_to_ptr.vmem [resolvable:$true] %s56
      %62 = dma.hbm_to_vmem [thread:$0]  %s5, 512, %s57, [#allocation9], 128, 128, 8
    $region25: #{tpu_custom_call.1} parent=1 // pred_fallthru
      _
    // Predicated region
    $region26: #{tpu_custom_call.1} parent=1 // pred_check
      _
    $region27: #{tpu_custom_call.1} parent=1 // pred_check_branch
      %64 = sbr.rel (0) target = $region29
    $region28: #{tpu_custom_call.1} parent=1 // pred_region
      _
    $region29: #{tpu_custom_call.1} parent=1 // pred_fallthru
      _
    // Predicated region
    $region30: #{tpu_custom_call.1} parent=1 // pred_check
      _
    $region31: #{tpu_custom_call.1} parent=1 // pred_check_branch
      %66 = sbr.rel (0) target = $region33
    $region32: #{tpu_custom_call.1} parent=1 // pred_region
      _
    $region33: #{tpu_custom_call.1} parent=1 // pred_fallthru
      _
    // Predicated region
    $region34: #{tpu_custom_call.1} parent=1 // pred_check
      _
    $region35: #{tpu_custom_call.1} parent=1 // pred_check_branch
      %68 = sbr.rel (0) target = $region37
    $region36: #{tpu_custom_call.1} parent=1 // pred_region
      %69 = dma.done [#allocation3], 64
    $region37: #{tpu_custom_call.1} parent=1 // pred_fallthru
      _
    // Predicated region
    $region38: #{tpu_custom_call.1} parent=1 // pred_check
      _
    $region39: #{tpu_custom_call.1} parent=1 // pred_check_branch
      %71 = sbr.rel (0) target = $region41
    $region40: #{tpu_custom_call.1} parent=1 // pred_region
      %72 = dma.done [#allocation6], 64
    $region41: #{tpu_custom_call.1} parent=1 // pred_fallthru
      _
    // Predicated region
    $region42: #{tpu_custom_call.1} parent=1 // pred_check
      _
    $region43: #{tpu_custom_call.1} parent=1 // pred_check_branch
      %74 = sbr.rel (0) target = $region45
    $region44: #{tpu_custom_call.1} parent=1 // pred_region
      %75 = dma.done [#allocation6], 128
    $region45: #{tpu_custom_call.1} parent=1 // pred_fallthru
      _
    // Predicated region
    $region46: #{tpu_custom_call.1} parent=1 // pred_check
      _
    $region47: #{tpu_custom_call.1} parent=1 // pred_check_branch
      %77 = sbr.rel (0) target = $region49
    $region48: #{tpu_custom_call.1} parent=1 // pred_region
      %78 = dma.done [#allocation9], 512
    $region49: #{tpu_custom_call.1} parent=1 // pred_fallthru
      _
    %v79 = vld [vmem:[#allocation7] sm:$0xff]
    %v80 = vld [vmem:[#allocation8] sm:$0xff]
    %v81 = vld [vmem:[#allocation8 + $0x8] sm:$0xff]
    %v82 = vld [vmem:[#allocation8 + $0x10] sm:$0xff]
    %v83 = vld [vmem:[#allocation8 + $0x18] sm:$0xff]
    %v84 = vld [vmem:[%s3] sm:$0x1]
    %v85 = vld [vmem:[%s4] sm:$0x1]
    %v86 = vld [vmem:[%s6] sm:$0x1]
    %v87 = vld [vmem:[%s7] sm:$0x1]
    %v88 = vld [vmem:[#allocation2] sm:$0xf]
    %vm89 = vcmask 64512
    %v91 = vsel %vm89, %v88, 0
    %93 = vmatprep.subr.mxu0 0.0
    %94 = vmatpush1.msra.mxu0 %v79
    %95 = vmatprep.subr.mxu0 0.0
    %96 = vmatpush1.msra.mxu0 0.0
    %97 = vmatprep.subr.mxu0 0.0
    %98 = vmatpush1.msra.mxu0 0.0
    %99 = vmatprep.subr.mxu0 0.0
    %100 = vmatpush1.msra.mxu0 0.0
    %101 = vmatprep.subr.mxu0 0.0
    %102 = vmatpush1.msra.mxu0 0.0
    %103 = vmatprep.subr.mxu0 0.0
    %104 = vmatpush1.msra.mxu0 0.0
    %105 = vmatprep.subr.mxu0 0.0
    %106 = vmatpush1.msra.mxu0 0.0
    %107 = vmatprep.subr.mxu0 0.0
    %108 = vmatpush1.msra.mxu0 0.0
    %109 = vmatprep.subr.mxu0 0.0
    %110 = vmatpush1.msra.mxu0 0.0
    %111 = vmatprep.subr.mxu0 0.0
    %112 = vmatpush1.msra.mxu0 0.0
    %113 = vmatprep.subr.mxu0 0.0
    %114 = vmatpush1.msra.mxu0 0.0
    %115 = vmatprep.subr.mxu0 0.0
    %116 = vmatpush1.msra.mxu0 0.0
    %117 = vmatprep.subr.mxu0 0.0
    %118 = vmatpush1.msra.mxu0 0.0
    %119 = vmatprep.subr.mxu0 0.0
    %120 = vmatpush1.msra.mxu0 0.0
    %121 = vmatprep.subr.mxu0 0.0
    %122 = vmatpush1.msra.mxu0 0.0
    %123 = vmatprep.subr.mxu0 0.0
    %124 = vmatpush1.msra.mxu0 0.0
    %125 = vmatprep.subr.mxu0 0.0
    %126 = vmatpush1.msra.mxu0 0.0
    %127 = vmatprep.subr.mxu0 0.0
    %128 = vmatpush1.msra.mxu0 0.0
    %129 = vmatprep.subr.mxu0 0.0
    %130 = vmatpush1.msra.mxu0 0.0
    %131 = vmatprep.subr.mxu0 0.0
    %132 = vmatpush1.msra.mxu0 0.0
    %133 = vmatprep.subr.mxu0 0.0
    %134 = vmatpush1.msra.mxu0 0.0
    %135 = vmatprep.subr.mxu0 0.0
    %136 = vmatpush1.msra.mxu0 0.0
    %137 = vmatprep.subr.mxu0 0.0
    %138 = vmatpush1.msra.mxu0 0.0
    %139 = vmatprep.subr.mxu0 0.0
    %140 = vmatpush1.msra.mxu0 0.0
    %141 = vmatprep.subr.mxu0 0.0
    %142 = vmatpush1.msra.mxu0 0.0
    %143 = vmatprep.subr.mxu0 0.0
    %144 = vmatpush1.msra.mxu0 0.0
    %145 = vmatprep.subr.mxu0 0.0
    %146 = vmatpush1.msra.mxu0 0.0
    %147 = vmatprep.subr.mxu0 0.0
    %148 = vmatpush1.msra.mxu0 0.0
    %149 = vmatprep.subr.mxu0 0.0
    %150 = vmatpush1.msra.mxu0 0.0
    %151 = vmatprep.subr.mxu0 0.0
    %152 = vmatpush1.msra.mxu0 0.0
    %153 = vmatprep.subr.mxu0 0.0
    %154 = vmatpush1.msra.mxu0 0.0
    %155 = vmatprep.subr.mxu0 0.0
    %156 = vmatpush1.msra.mxu0 0.0
    %157 = vmatprep.mubr.f32.mxu0 0.0
    %158 = vmatmul.mubr.f32.gmra.mrb[0].mxu0 %v91
    %v159 = vpop.f32.mrb[0].mxu0
    %v160 = vadd.f32 0.0, %v159
    %v161 = vpop.f32.mrb[0].mxu0
    %162 = vdwg.mxu0
    %vm163 = vcmask 781312
    %v164 = vsel %vm163, %v160, 0.0
    %165 = vadd.xlane.f32.xlu0 %v164
    %v166 = vpop.xlane.xlu0 %165
    %v167 = vrcp.pop 96.0
    %v168 = vmul.f32 %v166, %v167
    %v169 = vsub.f32 %v160, %v168
    %v170 = vmul.f32 %v169, %v169
    %v171 = vsel %vm163, %v170, 0.0
    %172 = vadd.xlane.f32.xlu0 %v171
    %v173 = vpop.xlane.xlu0 %172
    %v174 = vmul.f32 %v173, %v167
    %v175 = vadd.f32 %v174, 1e-05
    %v176 = vrsqrt.pop %v175
    %v177 = vmul.f32 %v169, %v176
    %v179 = vlaneseq
    %v180 = vshrl.u32 %v179, 7
    %v181 = vsub.s32 0, %v180
    %v182 = vrot.slane %v84, %v181
    %v184 = vmul.f32 %v177, %v182
    %v186 = vlaneseq
    %v187 = vshrl.u32 %v186, 7
    %v188 = vsub.s32 0, %v187
    %v189 = vrot.slane %v85, %v188
    %v191 = vadd.f32 %v184, %v189
    %v192 = vld [vmem:[#allocation5] sm:$0xf]
    %vm193 = vcmask 261120
    %v195 = vsel %vm193, %v192, 0
    %197 = vmatprep.subr.mxu0 0.0
    %198 = vmatpush1.msra.mxu0 %v80
    %199 = vmatprep.subr.mxu0 0.0
    %200 = vmatpush1.msra.mxu0 %v81
    %201 = vmatprep.subr.mxu0 0.0
    %202 = vmatpush1.msra.mxu0 %v82
    %203 = vmatprep.subr.mxu0 0.0
    %204 = vmatpush1.msra.mxu0 %v83
    %205 = vmatprep.subr.mxu0 0.0
    %206 = vmatpush1.msra.mxu0 0.0
    %207 = vmatprep.subr.mxu0 0.0
    %208 = vmatpush1.msra.mxu0 0.0
    %209 = vmatprep.subr.mxu0 0.0
    %210 = vmatpush1.msra.mxu0 0.0
    %211 = vmatprep.subr.mxu0 0.0
    %212 = vmatpush1.msra.mxu0 0.0
    %213 = vmatprep.subr.mxu0 0.0
    %214 = vmatpush1.msra.mxu0 0.0
    %215 = vmatprep.subr.mxu0 0.0
    %216 = vmatpush1.msra.mxu0 0.0
    %217 = vmatprep.subr.mxu0 0.0
    %218 = vmatpush1.msra.mxu0 0.0
    %219 = vmatprep.subr.mxu0 0.0
    %220 = vmatpush1.msra.mxu0 0.0
    %221 = vmatprep.subr.mxu0 0.0
    %222 = vmatpush1.msra.mxu0 0.0
    %223 = vmatprep.subr.mxu0 0.0
    %224 = vmatpush1.msra.mxu0 0.0
    %225 = vmatprep.subr.mxu0 0.0
    %226 = vmatpush1.msra.mxu0 0.0
    %227 = vmatprep.subr.mxu0 0.0
    %228 = vmatpush1.msra.mxu0 0.0
    %229 = vmatprep.subr.mxu0 0.0
    %230 = vmatpush1.msra.mxu0 0.0
    %231 = vmatprep.subr.mxu0 0.0
    %232 = vmatpush1.msra.mxu0 0.0
    %233 = vmatprep.subr.mxu0 0.0
    %234 = vmatpush1.msra.mxu0 0.0
    %235 = vmatprep.subr.mxu0 0.0
    %236 = vmatpush1.msra.mxu0 0.0
    %237 = vmatprep.subr.mxu0 0.0
    %238 = vmatpush1.msra.mxu0 0.0
    %239 = vmatprep.subr.mxu0 0.0
    %240 = vmatpush1.msra.mxu0 0.0
    %241 = vmatprep.subr.mxu0 0.0
    %242 = vmatpush1.msra.mxu0 0.0
    %243 = vmatprep.subr.mxu0 0.0
    %244 = vmatpush1.msra.mxu0 0.0
    %245 = vmatprep.subr.mxu0 0.0
    %246 = vmatpush1.msra.mxu0 0.0
    %247 = vmatprep.subr.mxu0 0.0
    %248 = vmatpush1.msra.mxu0 0.0
    %249 = vmatprep.subr.mxu0 0.0
    %250 = vmatpush1.msra.mxu0 0.0
    %251 = vmatprep.subr.mxu0 0.0
    %252 = vmatpush1.msra.mxu0 0.0
    %253 = vmatprep.subr.mxu0 0.0
    %254 = vmatpush1.msra.mxu0 0.0
    %255 = vmatprep.subr.mxu0 0.0
    %256 = vmatpush1.msra.mxu0 0.0
    %257 = vmatprep.subr.mxu0 0.0
    %258 = vmatpush1.msra.mxu0 0.0
    %259 = vmatprep.subr.mxu0 0.0
    %260 = vmatpush1.msra.mxu0 0.0
    %261 = vmatprep.mubr.f32.mxu0 0.0
    %262 = vmatmul.mubr.f32.gmra.mrb[0].mxu0 %v195
    %v263 = vpop.f32.mrb[0].mxu0
    %v264 = vadd.f32 0.0, %v263
    %v265 = vpop.f32.mrb[0].mxu0
    %266 = vdwg.mxu0
    %v267 = vsel %vm163, %v264, 0.0
    %268 = vadd.xlane.f32.xlu0 %v267
    %v269 = vpop.xlane.xlu0 %268
    %v270 = vmul.f32 %v269, %v167
    %v271 = vsub.f32 %v264, %v270
    %v272 = vmul.f32 %v271, %v271
    %v273 = vsel %vm163, %v272, 0.0
    %274 = vadd.xlane.f32.xlu0 %v273
    %v275 = vpop.xlane.xlu0 %274
    %v276 = vmul.f32 %v275, %v167
    %v277 = vadd.f32 %v276, 1e-05
    %v278 = vrsqrt.pop %v277
    %v279 = vmul.f32 %v271, %v278
    %v281 = vlaneseq
    %v282 = vshrl.u32 %v281, 7
    %v283 = vsub.s32 0, %v282
    %v284 = vrot.slane %v86, %v283
    %v286 = vmul.f32 %v279, %v284
    %v288 = vlaneseq
    %v289 = vshrl.u32 %v288, 7
    %v290 = vsub.s32 0, %v289
    %v291 = vrot.slane %v87, %v290
    %v293 = vadd.f32 %v286, %v291
    %v294 = vadd.f32 %v191, %v293
    %v295 = vxor.u32 %v294, 2147483648
    %v296 = vmul.f32 %v295, 1.442695
    %v297 = vpow.pop %v296
    %v298 = vadd.f32 %v297, 1.0
    %v299 = vrcp.pop %v298
    %v300 = vmul.f32 1.0, %v299
    %302 = vrot.lane.b32.xlu0 %v293, 64
    %v303 = vpop.permute.xlu0 %302
    %v305 = vmul.f32 %v300, %v303
    %307 = vrot.lane.b32.xlu0 %v305, 64
    %v308 = vpop.permute.xlu0 %307
    %v310 = vadd.f32 %v191, %v308
    %v311 = vtanh.pop %v310
    %313 = vrot.lane.b32.xlu0 %v311, 64
    %v314 = vpop.permute.xlu0 %313
    %v316 = vsub.f32 %v192, %v314
    %318 = vrot.lane.b32.xlu0 %v316, 32
    %v319 = vpop.permute.xlu0 %318
    %v321 = vmul.f32 %v300, %v319
    %323 = vrot.lane.b32.xlu0 %v321, 32
    %v324 = vpop.permute.xlu0 %323
    %v326 = vadd.f32 %v311, %v324
    %328 = vrot.lane.b32.xlu0 %v326, 64
    %v329 = vpop.permute.xlu0 %328
    %vm331 = vcmask 257024
    %332 = vst.msk [vmem:[#allocation10] sm:$0xf] %vm331, %v329
    // Predicated region
    $region50: #{tpu_custom_call.1} parent=1 // pred_check
      _
    $region51: #{tpu_custom_call.1} parent=1 // pred_check_branch
      %334 = sbr.rel (0) target = $region53
    $region52: #{tpu_custom_call.1} parent=1 // pred_region
      %s336 = ssub.s32 64, 64
      %337 = vsyncadd [#allocation4], %s336
      %s339 = sshll.u32 [#allocation10], 4
      %s340 = int_to_ptr.vmem [resolvable:$true] %s339
      %342 = dma.vmem_to_hbm [thread:$0]  %s340, 64, %s8, [#allocation4]
    $region53: #{tpu_custom_call.1} parent=1 // pred_fallthru
      _
    // Predicated region
    $region54: #{tpu_custom_call.1} parent=1 // pred_check
      _
    $region55: #{tpu_custom_call.1} parent=1 // pred_check_branch
      %344 = sbr.rel (0) target = $region57
    $region56: #{tpu_custom_call.1} parent=1 // pred_region
      %345 = dma.done [#allocation4], 64
    $region57: #{tpu_custom_call.1} parent=1 // pred_fallthru
      _
    %346 = vsyncpa [#allocation3], 1
    %347 = vsyncpa [#allocation6], 1
    %348 = vsyncpa [#allocation9], 1
    %349 = vsyncpa [#allocation4], 1

</llo_original>
